<compile_context>
chip_gen: v6e
topology: v6e:2x2x1
jax: 0.10.0
libtpu: 0.0.40
codegen_flags: <defaults>
</compile_context>

<pallas_src>
import jax
import jax.numpy as jnp
from jax.experimental import pallas as pl
from jax.experimental.pallas import tpu as pltpu

C_IN = 3      # input channels for every conv
C_OUT = 3     # output channels for every conv
K1, K2, K3 = 3, 2, 1
BN_EPS = 1e-5


def _fused_kernel(p_ref, w_ref, gb_ref, out_ref):
    # One MXU matmul produces both conv outputs:
    #   rows 0-2 = s = w1*p1 + b1
    #   rows 3-5 = u = w3*(s+t) + b3   (w3 / biases pre-folded into Wbig,
    #                                   bias column paired with the ones-row of P)
    su = jnp.dot(w_ref[...], p_ref[...],
                 preferred_element_type=jnp.float32)                 # (6, M)
    u = su[3:6, :]                                                   # (3, M)

    # BatchNorm2d, training mode (batch stats, biased variance), single pass
    # over the flattened N*OH*OW lane axis.
    inv_m = 1.0 / u.shape[1]
    mean = jnp.sum(u, axis=1, keepdims=True) * inv_m                 # (3, 1)
    var = jnp.sum(u * u, axis=1, keepdims=True) * inv_m - mean * mean
    scale = gb_ref[:, 0:1] * jax.lax.rsqrt(var + BN_EPS)             # gamma * rsqrt
    shift = gb_ref[:, 1:2] - mean * scale                            # beta - mean*scale
    y = u * scale + shift                                            # (3, M)

    # Single stacked, lane-dense output buffer: rows 0-2=s, 3-5=u, 6-8=y.
    out_ref[0:6, :] = su
    out_ref[6:9, :] = y


def _im2col(x, K, OH, OW):
    """x: (N, C, IH, IW) -> patches (C*K*K, N*OH*OW), row order = (c, kh, kw).

    Single gather + transpose + reshape (no Python-loop slice/stack chain).
    """
    N, C = x.shape[0], x.shape[1]
    ih = jnp.arange(K)[:, None] + jnp.arange(OH)[None, :]            # (K, OH)
    iw = jnp.arange(K)[:, None] + jnp.arange(OW)[None, :]            # (K, OW)
    # (N, C, K, OH, K, OW): p[n,c,kh,oh,kw,ow] = x[n,c,oh+kh,ow+kw]
    p = x[:, :, ih[:, :, None, None], iw[None, None, :, :]]
    return p.transpose(1, 2, 4, 0, 3, 5).reshape(C * K * K, N * OH * OW)


def model_forward(x2, x3, params):
    w1, b1, w2, b2, w3, b3, gamma, beta = params
    N = x2.shape[0]
    OH = x2.shape[2] - (K1 - 1)
    OW = x2.shape[3] - (K1 - 1)
    assert x3.shape[2] - (K2 - 1) == OH and x3.shape[3] - (K2 - 1) == OW, \
        "x3 spatial dims must make conv2 output match conv1 output"
    M = N * OH * OW

    # ---- wrapper-side layout plumbing (lane-dense slabs) --------------------
    p1 = _im2col(x2, K1, OH, OW)                                     # (27, M)
    p2 = _im2col(x3, K2, OH, OW)                                     # (12, n3*OH*OW)
    if x3.shape[0] != N:
        p2 = jnp.tile(p2, (1, N // x3.shape[0]))                     # t broadcasts over batch
    ones = jnp.ones((1, M), jnp.float32)                             # bias row
    P = jnp.concatenate([p1, p2, ones], axis=0)                      # (40, M)

    w1f = w1.reshape(C_OUT, -1)                                      # (3, 27)
    w2f = w2.reshape(C_OUT, -1)                                      # (3, 12)
    w3f = w3.reshape(C_OUT, C_IN)                                    # (3, 3)
    # Fused weight slab: rows 0-2 -> s, rows 3-5 -> u (w3 pre-folded);
    # last column carries the folded biases (pairs with the ones-row of P).
    w_s = jnp.concatenate(
        [w1f, jnp.zeros((C_OUT, w2f.shape[1]), jnp.float32), b1.reshape(C_OUT, 1)],
        axis=1)                                                      # (3, 40)
    w_u = jnp.concatenate(
        [w3f @ w1f, w3f @ w2f, (w3f @ (b1 + b2) + b3).reshape(C_OUT, 1)],
        axis=1)                                                      # (3, 40)
    Wbig = jnp.concatenate([w_s, w_u], axis=0)                       # (6, 40)

    gb = jnp.stack([gamma, beta], axis=1)                            # (3, 2)

    vmem = pl.BlockSpec(memory_space=pltpu.MemorySpace.VMEM)
    out = pl.pallas_call(
        _fused_kernel,
        out_shape=jax.ShapeDtypeStruct((3 * C_OUT, M), jnp.float32), # [s; u; y]
        in_specs=[vmem, vmem, vmem],
        out_specs=vmem,
    )(P, Wbig, gb)

    # Back to NCHW outside the kernel (pure layout work in XLA).
    to_nchw = lambda a: a.reshape(C_OUT, N, OH, OW).transpose(1, 0, 2, 3)
    return to_nchw(out[0:3]), to_nchw(out[3:6]), to_nchw(out[6:9])


def _ref_forward(x2, x3, params):
    """Pure-JAX reference (XLA convs) for correctness checking."""
    w1, b1, w2, b2, w3, b3, gamma, beta = params
    dn = ('NCHW', 'OIHW', 'NCHW')
    conv = lambda x, w: jax.lax.conv_general_dilated(x, w, (1, 1), 'VALID',
                                                     dimension_numbers=dn)
    s = conv(x2, w1) + b1[None, :, None, None]
    t = conv(x3, w2) + b2[None, :, None, None]
    u = conv(s + t, w3) + b3[None, :, None, None]
    mean = jnp.mean(u, axis=(0, 2, 3), keepdims=True)
    var = jnp.mean((u - mean) ** 2, axis=(0, 2, 3), keepdims=True)
    y = (u - mean) / jnp.sqrt(var + BN_EPS) * gamma[None, :, None, None] \
        + beta[None, :, None, None]
    return s, u, y


if __name__ == "__main__":
    key = jax.random.PRNGKey(0)
    ks = jax.random.split(key, 8)

    N = 16
    x2 = jax.random.normal(ks[0], (N, 3, 6, 6), jnp.float32)
    x3 = jax.random.normal(ks[1], (1, 3, 5, 5), jnp.float32)

    # Deterministic synthetic parameters (shapes from the nn.Module __init__).
    w1 = 0.2 * jax.random.normal(ks[2], (3, 3, 3, 3), jnp.float32)
    b1 = 0.1 * jax.random.normal(ks[3], (3,), jnp.float32)
    w2 = 0.2 * jax.random.normal(ks[4], (3, 3, 2, 2), jnp.float32)
    b2 = 0.1 * jax.random.normal(ks[5], (3,), jnp.float32)
    w3 = 0.2 * jax.random.normal(ks[6], (3, 3, 1, 1), jnp.float32)
    b3 = 0.1 * jax.random.normal(ks[7], (3,), jnp.float32)
    gamma = jnp.ones((3,), jnp.float32)    # BatchNorm2d affine weight init
    beta = jnp.zeros((3,), jnp.float32)    # BatchNorm2d affine bias init
    params = (w1, b1, w2, b2, w3, b3, gamma, beta)

    fwd = jax.jit(model_forward)
    s, u, y = fwd(x2, x3, params)
    jax.block_until_ready((s, u, y))

    s_ref, u_ref, y_ref = _ref_forward(x2, x3, params)
    assert jnp.allclose(s, s_ref, atol=1e-4, rtol=1e-4), "s mismatch"
    assert jnp.allclose(u, u_ref, atol=1e-4, rtol=1e-4), "u mismatch"
    assert jnp.allclose(y, y_ref, atol=1e-4, rtol=1e-4), "y mismatch"

    print("KERNEL_OK")
</pallas_src>

<mosaic_0001>
module attributes {stable_mosaic.version = 11 : i64} {
  func.func @_fused_kernel(%arg0: memref<40x256xf32, #tpu.memory_space<vmem>>, %arg1: memref<6x40xf32, #tpu.memory_space<vmem>>, %arg2: memref<3x2xf32, #tpu.memory_space<vmem>>, %arg3: memref<9x256xf32, #tpu.memory_space<vmem>>) attributes {dimension_semantics = [], scalar_prefetch = 0 : i64, scratch_operands = 0 : i64, tpu.core_type = #tpu.core_type<tc>} {
    %c0 = arith.constant 0 : index
    %c0_0 = arith.constant 0 : index
    %0 = vector.load %arg1[%c0, %c0_0] : memref<6x40xf32, #tpu.memory_space<vmem>>, vector<6x40xf32>
    %c0_1 = arith.constant 0 : index
    %c0_2 = arith.constant 0 : index
    %1 = vector.load %arg0[%c0_1, %c0_2] : memref<40x256xf32, #tpu.memory_space<vmem>>, vector<40x256xf32>
    %cst = arith.constant dense<0.000000e+00> : vector<6x256xf32>
    %2 = tpu.matmul %0, %1, %cst {dimension_numbers = #tpu.dot_dimension_numbers<[1], [0], [0], [1], [0, 0, 1, 1], [], []>} : vector<6x40xf32>, vector<40x256xf32>, vector<6x256xf32> -> vector<6x256xf32>
    %3 = vector.extract_strided_slice %2 {offsets = [3, 0], sizes = [3, 256], strides = [1, 1]} : vector<6x256xf32> to vector<3x256xf32>
    %cst_3 = arith.constant dense<0.000000e+00> : vector<3xf32>
    %4 = vector.multi_reduction <add>, %3, %cst_3 [1] : vector<3x256xf32> to vector<3xf32>
    %5 = vector.shape_cast %4 : vector<3xf32> to vector<3x1xf32>
    %cst_4 = arith.constant 3.906250e-03 : f32
    %6 = vector.broadcast %cst_4 : f32 to vector<3x1xf32>
    %7 = arith.mulf %5, %6 : vector<3x1xf32>
    %8 = arith.mulf %3, %3 : vector<3x256xf32>
    %cst_5 = arith.constant dense<0.000000e+00> : vector<3xf32>
    %9 = vector.multi_reduction <add>, %8, %cst_5 [1] : vector<3x256xf32> to vector<3xf32>
    %10 = vector.shape_cast %9 : vector<3xf32> to vector<3x1xf32>
    %cst_6 = arith.constant 3.906250e-03 : f32
    %11 = vector.broadcast %cst_6 : f32 to vector<3x1xf32>
    %12 = arith.mulf %10, %11 : vector<3x1xf32>
    %13 = arith.mulf %7, %7 : vector<3x1xf32>
    %14 = arith.subf %12, %13 : vector<3x1xf32>
    %c0_7 = arith.constant 0 : index
    %c0_8 = arith.constant 0 : index
    %15 = vector.load %arg2[%c0_7, %c0_8] : memref<3x2xf32, #tpu.memory_space<vmem>>, vector<3x1xf32>
    %cst_9 = arith.constant 9.99999974E-6 : f32
    %16 = vector.broadcast %cst_9 : f32 to vector<3x1xf32>
    %17 = arith.addf %14, %16 : vector<3x1xf32>
    %18 = math.rsqrt %17 : vector<3x1xf32>
    %19 = arith.mulf %15, %18 : vector<3x1xf32>
    %c0_10 = arith.constant 0 : index
    %c1 = arith.constant 1 : index
    %20 = vector.load %arg2[%c0_10, %c1] : memref<3x2xf32, #tpu.memory_space<vmem>>, vector<3x1xf32>
    %21 = arith.mulf %7, %19 : vector<3x1xf32>
    %22 = arith.subf %20, %21 : vector<3x1xf32>
    %23 = vector.broadcast %19 : vector<3x1xf32> to vector<3x256xf32>
    %24 = arith.mulf %3, %23 : vector<3x256xf32>
    %25 = vector.broadcast %22 : vector<3x1xf32> to vector<3x256xf32>
    %26 = arith.addf %24, %25 : vector<3x256xf32>
    %c0_11 = arith.constant 0 : index
    %c0_12 = arith.constant 0 : index
    %27 = vector.load %arg3[%c0_11, %c0_12] : memref<9x256xf32, #tpu.memory_space<vmem>>, vector<6x256xf32>
    tpu.vector_store %arg3[%c0_11, %c0_12], %2 {strides = array<i32>} : memref<9x256xf32, #tpu.memory_space<vmem>>, vector<6x256xf32>,
    %c6 = arith.constant 6 : index
    %c0_13 = arith.constant 0 : index
    %28 = vector.load %arg3[%c6, %c0_13] : memref<9x256xf32, #tpu.memory_space<vmem>>, vector<3x256xf32>
    tpu.vector_store %arg3[%c6, %c0_13], %26 {strides = array<i32>} : memref<9x256xf32, #tpu.memory_space<vmem>>, vector<3x256xf32>,
    return
  }
}

</mosaic_0001>

<llo_original>
// kernel: tile.7
$region0: #{tile.7}
  %s0 = inlined_call_operand.vmem [shape: f32[12,16,16], index: 0, kind: input, shape index: {}]
  %s1 = inlined_call_operand.vmem [shape: f32[12,256], index: 1, kind: output, shape index: {}]
  %v2 = vld [vmem:[%s0] ss:$8 sm:$0xf]
  %v3 = vld [vmem:[%s0] ss:$8 sm:$0xf0]
  %vm4 = vcmask 1047556
  %v5 = vsel %vm4, %v3, %v2
  %vm6 = vcmask 130048
  %7 = vst.msk [vmem:[%s1] ss:$8 sm:$0x3] %vm6, %v5
  %s8 = scalar_lea.vmem %s1, 4294967281
  %9 = vst.msk [vmem:[%s8] ss:$8 sm:$0xc] %vm6, %v5
  %s10 = scalar_lea.vmem %s1, 4294967266
  %11 = vst.msk [vmem:[%s10] ss:$8 sm:$0x30] %vm6, %v5
  %s12 = scalar_lea.vmem %s1, 4294967251
  %13 = vst.msk [vmem:[%s12] ss:$8 sm:$0xc0] %vm6, %v5
  %s14 = scalar_lea.vmem %s0, 64
  %v15 = vld [vmem:[%s14] ss:$8 sm:$0xf]
  %s16 = scalar_lea.vmem %s0, 64
  %v17 = vld [vmem:[%s16] ss:$8 sm:$0xf0]
  %vm18 = vcmask 1047556
  %v19 = vsel %vm18, %v17, %v15
  %vm20 = vcmask 130048
  %s21 = scalar_lea.vmem %s1, 4
  %22 = vst.msk [vmem:[%s21] ss:$8 sm:$0x3] %vm20, %v19
  %s23 = scalar_lea.vmem %s1, 4294967285
  %24 = vst.msk [vmem:[%s23] ss:$8 sm:$0xc] %vm20, %v19
  %s25 = scalar_lea.vmem %s1, 4294967270
  %26 = vst.msk [vmem:[%s25] ss:$8 sm:$0x30] %vm20, %v19
  %s27 = scalar_lea.vmem %s1, 4294967255
  %28 = vst.msk [vmem:[%s27] ss:$8 sm:$0xc0] %vm20, %v19
  %s29 = scalar_lea.vmem %s0, 128
  %v30 = vld [vmem:[%s29] ss:$8 sm:$0xf]
  %s31 = scalar_lea.vmem %s0, 128
  %v32 = vld [vmem:[%s31] ss:$8 sm:$0xf0]
  %vm33 = vcmask 1047556
  %v34 = vsel %vm33, %v32, %v30
  %vm35 = vcmask 130048
  %s36 = scalar_lea.vmem %s1, 16
  %37 = vst.msk [vmem:[%s36] ss:$8 sm:$0x3] %vm35, %v34
  %s38 = scalar_lea.vmem %s1, 1
  %39 = vst.msk [vmem:[%s38] ss:$8 sm:$0xc] %vm35, %v34
  %s40 = scalar_lea.vmem %s1, 4294967282
  %41 = vst.msk [vmem:[%s40] ss:$8 sm:$0x30] %vm35, %v34
  %s42 = scalar_lea.vmem %s1, 4294967267
  %43 = vst.msk [vmem:[%s42] ss:$8 sm:$0xc0] %vm35, %v34
  %s44 = scalar_lea.vmem %s0, 7
  %s45 = smov 3
  %v46 = vld [vmem:[%s44] ss:$16 sm:%s45]
  %s47 = scalar_lea.vmem %s0, 7
  %s48 = smov 12
  %v49 = vld [vmem:[%s47] ss:$16 sm:%s48]
  %vm50 = vcmask 1043458
  %v51 = vsel %vm50, %v49, %v46
  %s52 = scalar_lea.vmem %s0, 7
  %s53 = smov 48
  %v54 = vld [vmem:[%s52] ss:$16 sm:%s53]
  %vm55 = vcmask 1045508
  %v56 = vsel %vm55, %v54, %v51
  %s57 = scalar_lea.vmem %s0, 7
  %s58 = smov 192
  %v59 = vld [vmem:[%s57] ss:$16 sm:%s58]
  %vm60 = vcmask 1047558
  %v61 = vsel %vm60, %v59, %v56
  %62 = vrot.lane.b32.xlu0 %v61, 112
  %v63 = vpop.permute.xlu0 %62
  %vm64 = vcmask 1048448
  %65 = vst.msk [vmem:[%s1] sm:$0xff] %vm64, %v63
  %s66 = scalar_lea.vmem %s0, 15
  %s67 = smov 3
  %v68 = vld [vmem:[%s66] ss:$16 sm:%s67]
  %s69 = scalar_lea.vmem %s0, 15
  %s70 = smov 12
  %v71 = vld [vmem:[%s69] ss:$16 sm:%s70]
  %vm72 = vcmask 1043458
  %v73 = vsel %vm72, %v71, %v68
  %s74 = scalar_lea.vmem %s0, 15
  %s75 = smov 48
  %v76 = vld [vmem:[%s74] ss:$16 sm:%s75]
  %vm77 = vcmask 1045508
  %v78 = vsel %vm77, %v76, %v73
  %s79 = scalar_lea.vmem %s0, 15
  %s80 = smov 192
  %v81 = vld [vmem:[%s79] ss:$16 sm:%s80]
  %vm82 = vcmask 1047558
  %v83 = vsel %vm82, %v81, %v78
  %84 = vrot.lane.b32.xlu0 %v83, 112
  %v85 = vpop.permute.xlu0 %84
  %vm86 = vcmask 1048448
  %s87 = scalar_lea.vmem %s1, 8
  %88 = vst.msk [vmem:[%s87] sm:$0xff] %vm86, %v85
  %s89 = scalar_lea.vmem %s0, 135
  %s90 = smov 3
  %v91 = vld [vmem:[%s89] ss:$16 sm:%s90]
  %s92 = scalar_lea.vmem %s0, 135
  %s93 = smov 12
  %v94 = vld [vmem:[%s92] ss:$16 sm:%s93]
  %vm95 = vcmask 1043458
  %v96 = vsel %vm95, %v94, %v91
  %s97 = scalar_lea.vmem %s0, 79
  %s98 = smov 48
  %v99 = vld [vmem:[%s97] ss:$16 sm:%s98]
  %vm100 = vcmask 1045508
  %v101 = vsel %vm100, %v99, %v96
  %s102 = scalar_lea.vmem %s0, 79
  %s103 = smov 192
  %v104 = vld [vmem:[%s102] ss:$16 sm:%s103]
  %vm105 = vcmask 1047558
  %v106 = vsel %vm105, %v104, %v101
  %107 = vrot.lane.b32.xlu0 %v106, 112
  %v108 = vpop.permute.xlu0 %107
  %vm109 = vcmask 1048448
  %s110 = scalar_lea.vmem %s1, 16
  %111 = vst.msk [vmem:[%s110] sm:$0xf] %vm109, %v108
  %s112 = scalar_lea.vmem %s1, 20
  %113 = vst.msk [vmem:[%s112] sm:$0xf0] %vm109, %v108
  %s114 = scalar_lea.vmem %s0, 6
  %s115 = smov 3
  %v116 = vld [vmem:[%s114] ss:$16 sm:%s115]
  %s117 = scalar_lea.vmem %s0, 6
  %s118 = smov 12
  %v119 = vld [vmem:[%s117] ss:$16 sm:%s118]
  %vm120 = vcmask 1043458
  %v121 = vsel %vm120, %v119, %v116
  %s122 = scalar_lea.vmem %s0, 6
  %s123 = smov 48
  %v124 = vld [vmem:[%s122] ss:$16 sm:%s123]
  %vm125 = vcmask 1045508
  %v126 = vsel %vm125, %v124, %v121
  %s127 = scalar_lea.vmem %s0, 6
  %s128 = smov 192
  %v129 = vld [vmem:[%s127] ss:$16 sm:%s128]
  %vm130 = vcmask 1047558
  %v131 = vsel %vm130, %v129, %v126
  %132 = vrot.lane.b32.xlu0 %v131, 96
  %v133 = vpop.permute.xlu0 %132
  %vm134 = vcmask 917248
  %135 = vst.msk [vmem:[%s1] sm:$0xff] %vm134, %v133
  %s136 = scalar_lea.vmem %s0, 14
  %s137 = smov 3
  %v138 = vld [vmem:[%s136] ss:$16 sm:%s137]
  %s139 = scalar_lea.vmem %s0, 14
  %s140 = smov 12
  %v141 = vld [vmem:[%s139] ss:$16 sm:%s140]
  %vm142 = vcmask 1043458
  %v143 = vsel %vm142, %v141, %v138
  %s144 = scalar_lea.vmem %s0, 14
  %s145 = smov 48
  %v146 = vld [vmem:[%s144] ss:$16 sm:%s145]
  %vm147 = vcmask 1045508
  %v148 = vsel %vm147, %v146, %v143
  %s149 = scalar_lea.vmem %s0, 14
  %s150 = smov 192
  %v151 = vld [vmem:[%s149] ss:$16 sm:%s150]
  %vm152 = vcmask 1047558
  %v153 = vsel %vm152, %v151, %v148
  %154 = vrot.lane.b32.xlu0 %v153, 96
  %v155 = vpop.permute.xlu0 %154
  %vm156 = vcmask 917248
  %s157 = scalar_lea.vmem %s1, 8
  %158 = vst.msk [vmem:[%s157] sm:$0xff] %vm156, %v155
  %s159 = scalar_lea.vmem %s0, 134
  %s160 = smov 3
  %v161 = vld [vmem:[%s159] ss:$16 sm:%s160]
  %s162 = scalar_lea.vmem %s0, 134
  %s163 = smov 12
  %v164 = vld [vmem:[%s162] ss:$16 sm:%s163]
  %vm165 = vcmask 1043458
  %v166 = vsel %vm165, %v164, %v161
  %s167 = scalar_lea.vmem %s0, 78
  %s168 = smov 48
  %v169 = vld [vmem:[%s167] ss:$16 sm:%s168]
  %vm170 = vcmask 1045508
  %v171 = vsel %vm170, %v169, %v166
  %s172 = scalar_lea.vmem %s0, 78
  %s173 = smov 192
  %v174 = vld [vmem:[%s172] ss:$16 sm:%s173]
  %vm175 = vcmask 1047558
  %v176 = vsel %vm175, %v174, %v171
  %177 = vrot.lane.b32.xlu0 %v176, 96
  %v178 = vpop.permute.xlu0 %177
  %vm179 = vcmask 917248
  %s180 = scalar_lea.vmem %s1, 16
  %181 = vst.msk [vmem:[%s180] sm:$0xf] %vm179, %v178
  %s182 = scalar_lea.vmem %s1, 20
  %183 = vst.msk [vmem:[%s182] sm:$0xf0] %vm179, %v178
  %s184 = scalar_lea.vmem %s0, 5
  %s185 = smov 3
  %v186 = vld [vmem:[%s184] ss:$16 sm:%s185]
  %s187 = scalar_lea.vmem %s0, 5
  %s188 = smov 12
  %v189 = vld [vmem:[%s187] ss:$16 sm:%s188]
  %vm190 = vcmask 1043458
  %v191 = vsel %vm190, %v189, %v186
  %s192 = scalar_lea.vmem %s0, 5
  %s193 = smov 48
  %v194 = vld [vmem:[%s192] ss:$16 sm:%s193]
  %vm195 = vcmask 1045508
  %v196 = vsel %vm195, %v194, %v191
  %s197 = scalar_lea.vmem %s0, 5
  %s198 = smov 192
  %v199 = vld [vmem:[%s197] ss:$16 sm:%s198]
  %vm200 = vcmask 1047558
  %v201 = vsel %vm200, %v199, %v196
  %202 = vrot.lane.b32.xlu0 %v201, 80
  %v203 = vpop.permute.xlu0 %202
  %vm204 = vcmask 786048
  %205 = vst.msk [vmem:[%s1] sm:$0xff] %vm204, %v203
  %s206 = scalar_lea.vmem %s0, 13
  %s207 = smov 3
  %v208 = vld [vmem:[%s206] ss:$16 sm:%s207]
  %s209 = scalar_lea.vmem %s0, 13
  %s210 = smov 12
  %v211 = vld [vmem:[%s209] ss:$16 sm:%s210]
  %vm212 = vcmask 1043458
  %v213 = vsel %vm212, %v211, %v208
  %s214 = scalar_lea.vmem %s0, 13
  %s215 = smov 48
  %v216 = vld [vmem:[%s214] ss:$16 sm:%s215]
  %vm217 = vcmask 1045508
  %v218 = vsel %vm217, %v216, %v213
  %s219 = scalar_lea.vmem %s0, 13
  %s220 = smov 192
  %v221 = vld [vmem:[%s219] ss:$16 sm:%s220]
  %vm222 = vcmask 1047558
  %v223 = vsel %vm222, %v221, %v218
  %224 = vrot.lane.b32.xlu0 %v223, 80
  %v225 = vpop.permute.xlu0 %224
  %vm226 = vcmask 786048
  %s227 = scalar_lea.vmem %s1, 8
  %228 = vst.msk [vmem:[%s227] sm:$0xff] %vm226, %v225
  %s229 = scalar_lea.vmem %s0, 133
  %s230 = smov 3
  %v231 = vld [vmem:[%s229] ss:$16 sm:%s230]
  %s232 = scalar_lea.vmem %s0, 133
  %s233 = smov 12
  %v234 = vld [vmem:[%s232] ss:$16 sm:%s233]
  %vm235 = vcmask 1043458
  %v236 = vsel %vm235, %v234, %v231
  %s237 = scalar_lea.vmem %s0, 77
  %s238 = smov 48
  %v239 = vld [vmem:[%s237] ss:$16 sm:%s238]
  %vm240 = vcmask 1045508
  %v241 = vsel %vm240, %v239, %v236
  %s242 = scalar_lea.vmem %s0, 77
  %s243 = smov 192
  %v244 = vld [vmem:[%s242] ss:$16 sm:%s243]
  %vm245 = vcmask 1047558
  %v246 = vsel %vm245, %v244, %v241
  %247 = vrot.lane.b32.xlu0 %v246, 80
  %v248 = vpop.permute.xlu0 %247
  %vm249 = vcmask 786048
  %s250 = scalar_lea.vmem %s1, 16
  %251 = vst.msk [vmem:[%s250] sm:$0xf] %vm249, %v248
  %s252 = scalar_lea.vmem %s1, 20
  %253 = vst.msk [vmem:[%s252] sm:$0xf0] %vm249, %v248
  %s254 = scalar_lea.vmem %s0, 4
  %s255 = smov 3
  %v256 = vld [vmem:[%s254] ss:$16 sm:%s255]
  %s257 = scalar_lea.vmem %s0, 4
  %s258 = smov 12
  %v259 = vld [vmem:[%s257] ss:$16 sm:%s258]
  %vm260 = vcmask 1043458
  %v261 = vsel %vm260, %v259, %v256
  %s262 = scalar_lea.vmem %s0, 4
  %s263 = smov 48
  %v264 = vld [vmem:[%s262] ss:$16 sm:%s263]
  %vm265 = vcmask 1045508
  %v266 = vsel %vm265, %v264, %v261
  %s267 = scalar_lea.vmem %s0, 4
  %s268 = smov 192
  %v269 = vld [vmem:[%s267] ss:$16 sm:%s268]
  %vm270 = vcmask 1047558
  %v271 = vsel %vm270, %v269, %v266
  %272 = vrot.lane.b32.xlu0 %v271, 64
  %v273 = vpop.permute.xlu0 %272
  %vm274 = vcmask 654848
  %275 = vst.msk [vmem:[%s1] sm:$0xff] %vm274, %v273
  %s276 = scalar_lea.vmem %s0, 12
  %s277 = smov 3
  %v278 = vld [vmem:[%s276] ss:$16 sm:%s277]
  %s279 = scalar_lea.vmem %s0, 12
  %s280 = smov 12
  %v281 = vld [vmem:[%s279] ss:$16 sm:%s280]
  %vm282 = vcmask 1043458
  %v283 = vsel %vm282, %v281, %v278
  %s284 = scalar_lea.vmem %s0, 12
  %s285 = smov 48
  %v286 = vld [vmem:[%s284] ss:$16 sm:%s285]
  %vm287 = vcmask 1045508
  %v288 = vsel %vm287, %v286, %v283
  %s289 = scalar_lea.vmem %s0, 12
  %s290 = smov 192
  %v291 = vld [vmem:[%s289] ss:$16 sm:%s290]
  %vm292 = vcmask 1047558
  %v293 = vsel %vm292, %v291, %v288
  %294 = vrot.lane.b32.xlu0 %v293, 64
  %v295 = vpop.permute.xlu0 %294
  %vm296 = vcmask 654848
  %s297 = scalar_lea.vmem %s1, 8
  %298 = vst.msk [vmem:[%s297] sm:$0xff] %vm296, %v295
  %s299 = scalar_lea.vmem %s0, 132
  %s300 = smov 3
  %v301 = vld [vmem:[%s299] ss:$16 sm:%s300]
  %s302 = scalar_lea.vmem %s0, 132
  %s303 = smov 12
  %v304 = vld [vmem:[%s302] ss:$16 sm:%s303]
  %vm305 = vcmask 1043458
  %v306 = vsel %vm305, %v304, %v301
  %s307 = scalar_lea.vmem %s0, 76
  %s308 = smov 48
  %v309 = vld [vmem:[%s307] ss:$16 sm:%s308]
  %vm310 = vcmask 1045508
  %v311 = vsel %vm310, %v309, %v306
  %s312 = scalar_lea.vmem %s0, 76
  %s313 = smov 192
  %v314 = vld [vmem:[%s312] ss:$16 sm:%s313]
  %vm315 = vcmask 1047558
  %v316 = vsel %vm315, %v314, %v311
  %317 = vrot.lane.b32.xlu0 %v316, 64
  %v318 = vpop.permute.xlu0 %317
  %vm319 = vcmask 654848
  %s320 = scalar_lea.vmem %s1, 16
  %321 = vst.msk [vmem:[%s320] sm:$0xf] %vm319, %v318
  %s322 = scalar_lea.vmem %s1, 20
  %323 = vst.msk [vmem:[%s322] sm:$0xf0] %vm319, %v318
  %s324 = scalar_lea.vmem %s0, 3
  %s325 = smov 3
  %v326 = vld [vmem:[%s324] ss:$16 sm:%s325]
  %s327 = scalar_lea.vmem %s0, 3
  %s328 = smov 12
  %v329 = vld [vmem:[%s327] ss:$16 sm:%s328]
  %vm330 = vcmask 1043458
  %v331 = vsel %vm330, %v329, %v326
  %s332 = scalar_lea.vmem %s0, 3
  %s333 = smov 48
  %v334 = vld [vmem:[%s332] ss:$16 sm:%s333]
  %vm335 = vcmask 1045508
  %v336 = vsel %vm335, %v334, %v331
  %s337 = scalar_lea.vmem %s0, 3
  %s338 = smov 192
  %v339 = vld [vmem:[%s337] ss:$16 sm:%s338]
  %vm340 = vcmask 1047558
  %v341 = vsel %vm340, %v339, %v336
  %342 = vrot.lane.b32.xlu0 %v341, 48
  %v343 = vpop.permute.xlu0 %342
  %vm344 = vcmask 523648
  %345 = vst.msk [vmem:[%s1] sm:$0xff] %vm344, %v343
  %s346 = scalar_lea.vmem %s0, 11
  %s347 = smov 3
  %v348 = vld [vmem:[%s346] ss:$16 sm:%s347]
  %s349 = scalar_lea.vmem %s0, 11
  %s350 = smov 12
  %v351 = vld [vmem:[%s349] ss:$16 sm:%s350]
  %vm352 = vcmask 1043458
  %v353 = vsel %vm352, %v351, %v348
  %s354 = scalar_lea.vmem %s0, 11
  %s355 = smov 48
  %v356 = vld [vmem:[%s354] ss:$16 sm:%s355]
  %vm357 = vcmask 1045508
  %v358 = vsel %vm357, %v356, %v353
  %s359 = scalar_lea.vmem %s0, 11
  %s360 = smov 192
  %v361 = vld [vmem:[%s359] ss:$16 sm:%s360]
  %vm362 = vcmask 1047558
  %v363 = vsel %vm362, %v361, %v358
  %364 = vrot.lane.b32.xlu0 %v363, 48
  %v365 = vpop.permute.xlu0 %364
  %vm366 = vcmask 523648
  %s367 = scalar_lea.vmem %s1, 8
  %368 = vst.msk [vmem:[%s367] sm:$0xff] %vm366, %v365
  %s369 = scalar_lea.vmem %s0, 131
  %s370 = smov 3
  %v371 = vld [vmem:[%s369] ss:$16 sm:%s370]
  %s372 = scalar_lea.vmem %s0, 131
  %s373 = smov 12
  %v374 = vld [vmem:[%s372] ss:$16 sm:%s373]
  %vm375 = vcmask 1043458
  %v376 = vsel %vm375, %v374, %v371
  %s377 = scalar_lea.vmem %s0, 75
  %s378 = smov 48
  %v379 = vld [vmem:[%s377] ss:$16 sm:%s378]
  %vm380 = vcmask 1045508
  %v381 = vsel %vm380, %v379, %v376
  %s382 = scalar_lea.vmem %s0, 75
  %s383 = smov 192
  %v384 = vld [vmem:[%s382] ss:$16 sm:%s383]
  %vm385 = vcmask 1047558
  %v386 = vsel %vm385, %v384, %v381
  %387 = vrot.lane.b32.xlu0 %v386, 48
  %v388 = vpop.permute.xlu0 %387
  %vm389 = vcmask 523648
  %s390 = scalar_lea.vmem %s1, 16
  %391 = vst.msk [vmem:[%s390] sm:$0xf] %vm389, %v388
  %s392 = scalar_lea.vmem %s1, 20
  %393 = vst.msk [vmem:[%s392] sm:$0xf0] %vm389, %v388
  %s394 = scalar_lea.vmem %s0, 2
  %s395 = smov 3
  %v396 = vld [vmem:[%s394] ss:$16 sm:%s395]
  %s397 = scalar_lea.vmem %s0, 2
  %s398 = smov 12
  %v399 = vld [vmem:[%s397] ss:$16 sm:%s398]
  %vm400 = vcmask 1043458
  %v401 = vsel %vm400, %v399, %v396
  %s402 = scalar_lea.vmem %s0, 2
  %s403 = smov 48
  %v404 = vld [vmem:[%s402] ss:$16 sm:%s403]
  %vm405 = vcmask 1045508
  %v406 = vsel %vm405, %v404, %v401
  %s407 = scalar_lea.vmem %s0, 2
  %s408 = smov 192
  %v409 = vld [vmem:[%s407] ss:$16 sm:%s408]
  %vm410 = vcmask 1047558
  %v411 = vsel %vm410, %v409, %v406
  %412 = vrot.lane.b32.xlu0 %v411, 32
  %v413 = vpop.permute.xlu0 %412
  %vm414 = vcmask 392448
  %415 = vst.msk [vmem:[%s1] sm:$0xff] %vm414, %v413
  %s416 = scalar_lea.vmem %s0, 10
  %s417 = smov 3
  %v418 = vld [vmem:[%s416] ss:$16 sm:%s417]
  %s419 = scalar_lea.vmem %s0, 10
  %s420 = smov 12
  %v421 = vld [vmem:[%s419] ss:$16 sm:%s420]
  %vm422 = vcmask 1043458
  %v423 = vsel %vm422, %v421, %v418
  %s424 = scalar_lea.vmem %s0, 10
  %s425 = smov 48
  %v426 = vld [vmem:[%s424] ss:$16 sm:%s425]
  %vm427 = vcmask 1045508
  %v428 = vsel %vm427, %v426, %v423
  %s429 = scalar_lea.vmem %s0, 10
  %s430 = smov 192
  %v431 = vld [vmem:[%s429] ss:$16 sm:%s430]
  %vm432 = vcmask 1047558
  %v433 = vsel %vm432, %v431, %v428
  %434 = vrot.lane.b32.xlu0 %v433, 32
  %v435 = vpop.permute.xlu0 %434
  %vm436 = vcmask 392448
  %s437 = scalar_lea.vmem %s1, 8
  %438 = vst.msk [vmem:[%s437] sm:$0xff] %vm436, %v435
  %s439 = scalar_lea.vmem %s0, 130
  %s440 = smov 3
  %v441 = vld [vmem:[%s439] ss:$16 sm:%s440]
  %s442 = scalar_lea.vmem %s0, 130
  %s443 = smov 12
  %v444 = vld [vmem:[%s442] ss:$16 sm:%s443]
  %vm445 = vcmask 1043458
  %v446 = vsel %vm445, %v444, %v441
  %s447 = scalar_lea.vmem %s0, 74
  %s448 = smov 48
  %v449 = vld [vmem:[%s447] ss:$16 sm:%s448]
  %vm450 = vcmask 1045508
  %v451 = vsel %vm450, %v449, %v446
  %s452 = scalar_lea.vmem %s0, 74
  %s453 = smov 192
  %v454 = vld [vmem:[%s452] ss:$16 sm:%s453]
  %vm455 = vcmask 1047558
  %v456 = vsel %vm455, %v454, %v451
  %457 = vrot.lane.b32.xlu0 %v456, 32
  %v458 = vpop.permute.xlu0 %457
  %vm459 = vcmask 392448
  %s460 = scalar_lea.vmem %s1, 16
  %461 = vst.msk [vmem:[%s460] sm:$0xf] %vm459, %v458
  %s462 = scalar_lea.vmem %s1, 20
  %463 = vst.msk [vmem:[%s462] sm:$0xf0] %vm459, %v458
  %s464 = scalar_lea.vmem %s0, 1
  %s465 = smov 3
  %v466 = vld [vmem:[%s464] ss:$16 sm:%s465]
  %s467 = scalar_lea.vmem %s0, 1
  %s468 = smov 12
  %v469 = vld [vmem:[%s467] ss:$16 sm:%s468]
  %vm470 = vcmask 1043458
  %v471 = vsel %vm470, %v469, %v466
  %s472 = scalar_lea.vmem %s0, 1
  %s473 = smov 48
  %v474 = vld [vmem:[%s472] ss:$16 sm:%s473]
  %vm475 = vcmask 1045508
  %v476 = vsel %vm475, %v474, %v471
  %s477 = scalar_lea.vmem %s0, 1
  %s478 = smov 192
  %v479 = vld [vmem:[%s477] ss:$16 sm:%s478]
  %vm480 = vcmask 1047558
  %v481 = vsel %vm480, %v479, %v476
  %482 = vrot.lane.b32.xlu0 %v481, 16
  %v483 = vpop.permute.xlu0 %482
  %vm484 = vcmask 261248
  %485 = vst.msk [vmem:[%s1] sm:$0xff] %vm484, %v483
  %s486 = scalar_lea.vmem %s0, 9
  %s487 = smov 3
  %v488 = vld [vmem:[%s486] ss:$16 sm:%s487]
  %s489 = scalar_lea.vmem %s0, 9
  %s490 = smov 12
  %v491 = vld [vmem:[%s489] ss:$16 sm:%s490]
  %vm492 = vcmask 1043458
  %v493 = vsel %vm492, %v491, %v488
  %s494 = scalar_lea.vmem %s0, 9
  %s495 = smov 48
  %v496 = vld [vmem:[%s494] ss:$16 sm:%s495]
  %vm497 = vcmask 1045508
  %v498 = vsel %vm497, %v496, %v493
  %s499 = scalar_lea.vmem %s0, 9
  %s500 = smov 192
  %v501 = vld [vmem:[%s499] ss:$16 sm:%s500]
  %vm502 = vcmask 1047558
  %v503 = vsel %vm502, %v501, %v498
  %504 = vrot.lane.b32.xlu0 %v503, 16
  %v505 = vpop.permute.xlu0 %504
  %vm506 = vcmask 261248
  %s507 = scalar_lea.vmem %s1, 8
  %508 = vst.msk [vmem:[%s507] sm:$0xff] %vm506, %v505
  %s509 = scalar_lea.vmem %s0, 129
  %s510 = smov 3
  %v511 = vld [vmem:[%s509] ss:$16 sm:%s510]
  %s512 = scalar_lea.vmem %s0, 129
  %s513 = smov 12
  %v514 = vld [vmem:[%s512] ss:$16 sm:%s513]
  %vm515 = vcmask 1043458
  %v516 = vsel %vm515, %v514, %v511
  %s517 = scalar_lea.vmem %s0, 73
  %s518 = smov 48
  %v519 = vld [vmem:[%s517] ss:$16 sm:%s518]
  %vm520 = vcmask 1045508
  %v521 = vsel %vm520, %v519, %v516
  %s522 = scalar_lea.vmem %s0, 73
  %s523 = smov 192
  %v524 = vld [vmem:[%s522] ss:$16 sm:%s523]
  %vm525 = vcmask 1047558
  %v526 = vsel %vm525, %v524, %v521
  %527 = vrot.lane.b32.xlu0 %v526, 16
  %v528 = vpop.permute.xlu0 %527
  %vm529 = vcmask 261248
  %s530 = scalar_lea.vmem %s1, 16
  %531 = vst.msk [vmem:[%s530] sm:$0xf] %vm529, %v528
  %s532 = scalar_lea.vmem %s1, 20
  %533 = vst.msk [vmem:[%s532] sm:$0xf0] %vm529, %v528

// kernel: model_forward.1
$region0: #{model_forward.1}
  #allocation0 [shape = 'u32[]', space=smem, size = 0x4, offset = 0x4, fixed_abs, tag = 'smem constant byte address 0x4 - core index']
  #allocation1 [shape = 'u32[144,128]{1,0:T(1,128)}', space=vmem, size = 0x12000, scoped, tag = 'internal scratch']
  %s0 = inlined_call_operand.vmem [shape: f32[40,256], index: 0, kind: input, shape index: {}]
  %s1 = inlined_call_operand.vmem [shape: f32[6,40], index: 1, kind: input, shape index: {}]
  %s2 = inlined_call_operand.vmem [shape: f32[3,2], index: 2, kind: input, shape index: {}]
  %s3 = inlined_call_operand.vmem [shape: f32[9,256], index: 3, kind: output, shape index: {}]
  %s4 = sld [smem:[#allocation0]]
  $region22: #{model_forward.1} parent=0
    _
  %s6 = ssub.s32 1, %s4
  %s7 = scalar_select 0, %s6, %s4
  // Predicated region
  $region2: #{model_forward.1} parent=0 // pred_check
    _
  $region3: #{model_forward.1} parent=0 // pred_check_branch
    %9 = sbr.rel (0) target = $region5
  $region4: #{model_forward.1} parent=0 // pred_region
    _
  $region5: #{model_forward.1} parent=0 // pred_fallthru
    _
  // Predicated region
  $region6: #{model_forward.1} parent=0 // pred_check
    _
  $region7: #{model_forward.1} parent=0 // pred_check_branch
    %11 = sbr.rel (0) target = $region9
  $region8: #{model_forward.1} parent=0 // pred_region
    _
  $region9: #{model_forward.1} parent=0 // pred_fallthru
    _
  // Predicated region
  $region10: #{model_forward.1} parent=0 // pred_check
    _
  $region11: #{model_forward.1} parent=0 // pred_check_branch
    %13 = sbr.rel (0) target = $region13
  $region12: #{model_forward.1} parent=0 // pred_region
    _
  $region13: #{model_forward.1} parent=0 // pred_fallthru
    _
  %v14 = vld [vmem:[%s1] sm:$0x3f]
  %v15 = vld [vmem:[%s0] sm:$0xff]
  %v16 = vld [vmem:[%s0 + $0x8] sm:$0xff]
  %v17 = vld [vmem:[%s0 + $0x10] sm:$0xff]
  %v18 = vld [vmem:[%s0 + $0x18] sm:$0xff]
  %v19 = vld [vmem:[%s0 + $0x20] sm:$0xff]
  %v20 = vld [vmem:[%s0 + $0x28] sm:$0xff]
  %v21 = vld [vmem:[%s0 + $0x30] sm:$0xff]
  %v22 = vld [vmem:[%s0 + $0x38] sm:$0xff]
  %v23 = vld [vmem:[%s0 + $0x40] sm:$0xff]
  %v24 = vld [vmem:[%s0 + $0x48] sm:$0xff]
  %vm25 = vcmask 326656
  %v27 = vsel %vm25, %v14, 0
  %29 = vmatprep.subr.mxu0 0.0
  %30 = vmatpush1.msra.mxu0 0.0
  %31 = vmatprep.subr.mxu0 0.0
  %32 = vmatpush1.msra.mxu0 0.0
  %33 = vmatprep.subr.mxu0 0.0
  %34 = vmatpush1.msra.mxu0 0.0
  %35 = vmatprep.subr.mxu0 0.0
  %36 = vmatpush1.msra.mxu0 0.0
  %37 = vmatprep.subr.mxu0 0.0
  %38 = vmatpush1.msra.mxu0 0.0
  %39 = vmatprep.subr.mxu0 0.0
  %40 = vmatpush1.msra.mxu0 0.0
  %41 = vmatprep.subr.mxu0 0.0
  %42 = vmatpush1.msra.mxu0 0.0
  %43 = vmatprep.subr.mxu0 0.0
  %44 = vmatpush1.msra.mxu0 0.0
  %45 = vmatprep.subr.mxu0 0.0
  %46 = vmatpush1.msra.mxu0 0.0
  %47 = vmatprep.subr.mxu0 0.0
  %48 = vmatpush1.msra.mxu0 0.0
  %49 = vmatprep.subr.mxu0 0.0
  %50 = vmatpush1.msra.mxu0 0.0
  %51 = vmatprep.subr.mxu0 %v24
  %52 = vmatpush1.msra.mxu0 %v23
  %53 = vmatprep.subr.mxu0 %v22
  %54 = vmatpush1.msra.mxu0 %v21
  %55 = vmatprep.subr.mxu0 %v20
  %56 = vmatpush1.msra.mxu0 %v19
  %57 = vmatprep.subr.mxu0 %v18
  %58 = vmatpush1.msra.mxu0 %v17
  %59 = vmatprep.subr.mxu0 %v16
  %60 = vmatpush1.msra.mxu0 %v15
  %61 = vmatprep.subr.mxu0 0.0
  %62 = vmatpush2.msra.mxu0 0.0
  %63 = vmatprep.subr.mxu0 0.0
  %64 = vmatpush2.msra.mxu0 0.0
  %65 = vmatprep.subr.mxu0 0.0
  %66 = vmatpush2.msra.mxu0 0.0
  %67 = vmatprep.subr.mxu0 0.0
  %68 = vmatpush2.msra.mxu0 0.0
  %69 = vmatprep.subr.mxu0 0.0
  %70 = vmatpush2.msra.mxu0 0.0
  %71 = vmatprep.subr.mxu0 0.0
  %72 = vmatpush2.msra.mxu0 0.0
  %73 = vmatprep.subr.mxu0 0.0
  %74 = vmatpush2.msra.mxu0 0.0
  %75 = vmatprep.subr.mxu0 0.0
  %76 = vmatpush2.msra.mxu0 0.0
  %77 = vmatprep.subr.mxu0 0.0
  %78 = vmatpush2.msra.mxu0 0.0
  %79 = vmatprep.subr.mxu0 0.0
  %80 = vmatpush2.msra.mxu0 0.0
  %81 = vmatprep.subr.mxu0 0.0
  %82 = vmatpush2.msra.mxu0 0.0
  %83 = vmatprep.subr.mxu0 0.0
  %84 = vmatpush2.msra.mxu0 0.0
  %85 = vmatprep.subr.mxu0 0.0
  %86 = vmatpush2.msra.mxu0 0.0
  %87 = vmatprep.subr.mxu0 0.0
  %88 = vmatpush2.msra.mxu0 0.0
  %89 = vmatprep.subr.mxu0 0.0
  %90 = vmatpush2.msra.mxu0 0.0
  %91 = vmatprep.subr.mxu0 0.0
  %92 = vmatpush2.msra.mxu0 0.0
  %93 = vmatprep.mubr.f32.mxu0 0.0
  %94 = vmatmul.mubr.f32.gmra.mxu0 %v27
  %v95 = vpop.f32.mrf.mxu0
  %v96 = vadd.f32 0.0, %v95
  %v97 = vpop.f32.mrf.mxu0
  %v98 = vadd.f32 0.0, %v97
  %99 = vdwg.mxu0
  %vm100 = vcmask 1045507
  %v101 = vsel %vm100, %v96, 0.0
  %v102 = vsel %vm100, %v98, 0.0
  %v103 = vadd.f32 %v101, %v102
  %104 = vadd.xlane.f32.xlu0 %v103
  %v105 = vpop.xlane.xlu0 %104
  %v106 = vmul.f32 %v105, 0.00390625
  %v107 = vmul.f32 %v96, %v96
  %v108 = vmul.f32 %v98, %v98
  %v109 = vsel %vm100, %v107, 0.0
  %v110 = vsel %vm100, %v108, 0.0
  %v111 = vadd.f32 %v109, %v110
  %112 = vadd.xlane.f32.xlu0 %v111
  %v113 = vpop.xlane.xlu0 %112
  %v114 = vmul.f32 %v113, 0.00390625
  %v115 = vmul.f32 %v106, %v106
  %v116 = vsub.f32 %v114, %v115
  %v117 = vld [vmem:[%s2] sm:$0x7]
  %v118 = vadd.f32 %v116, 1e-05
  %v119 = vrsqrt.pop %v118
  %v121 = vrot.slane %v119, 3
  %v123 = vmul.f32 %v117, %v121
  %v125 = vrot.slane %v123, 5
  %v127 = vmul.f32 %v106, %v125
  %v129 = vrot.slane %v127, 3
  %130 = vrot.lane.b32.xlu0 %v129, 1
  %v131 = vpop.permute.xlu0 %130
  %v133 = vsub.f32 %v117, %v131
  %134 = vset.pattern.permute.xlu0 0
  %135 = vperm.xlu0 %134, %v123
  %v136 = vpop.permute.xlu0 %135
  %v137 = vrot.slane %v136, 5
  %v139 = vmul.f32 %v96, %v137
  %v140 = vmul.f32 %v98, %v137
  %142 = vset.pattern.permute.xlu0 1
  %143 = vperm.xlu0 %142, %v133
  %v144 = vpop.permute.xlu0 %143
  %v145 = vrot.slane %v144, 5
  %v147 = vadd.f32 %v139, %v145
  %v148 = vadd.f32 %v140, %v145
  %149 = vst [vmem:[%s3] sm:$0x3f] %v96
  %150 = vst [vmem:[%s3 + $0x8] sm:$0x3f] %v98
  %v153 = vrot.slane %v147, 5
  %v154 = vrot.slane %v148, 5
  %157 = vst [vmem:[%s3] sm:$0xc0] %v153
  %158 = vst [vmem:[%s3 + $0x8] sm:$0xc0] %v154
  %159 = vst [vmem:[%s3 + $0x10] sm:$0x1] %v153
  %160 = vst [vmem:[%s3 + $0x18] sm:$0x1] %v154
  // Predicated region
  $region14: #{model_forward.1} parent=0 // pred_check
    _
  $region15: #{model_forward.1} parent=0 // pred_check_branch
    %162 = sbr.rel (0) target = $region17
  $region16: #{model_forward.1} parent=0 // pred_region
    _
  $region17: #{model_forward.1} parent=0 // pred_fallthru
    _
  // Predicated region
  $region18: #{model_forward.1} parent=0 // pred_check
    _
  $region19: #{model_forward.1} parent=0 // pred_check_branch
    %164 = sbr.rel (0) target = $region21
  $region20: #{model_forward.1} parent=0 // pred_region
    _
  $region21: #{model_forward.1} parent=0 // pred_fallthru
    _

</llo_original>
